<compile_context>
chip_gen: v5e
topology: v5e:2x2
jax: 0.10.0
libtpu: 0.0.40
codegen_flags: <defaults>
</compile_context>

<pallas_src>
import math
from functools import partial

import numpy as np
import jax
import jax.numpy as jnp
from jax.experimental import pallas as pl
from jax.experimental.pallas import tpu as pltpu


# ----------------------------- small helpers --------------------------------

def _round_up(x, m):
    return ((x + m - 1) // m) * m


def _tile_rows(M):
    """Pick an M-tile (multiple of 16 for bf16 packing) and the padded M."""
    if M <= 128:
        t = _round_up(max(M, 16), 16)
        return t, t
    t = 128
    return t, _round_up(M, t)


def _gelu_tanh(x):
    # tanh-approx GELU (erf lowering inside Mosaic not guaranteed); diff ~1e-3.
    c = math.sqrt(2.0 / math.pi)
    return 0.5 * x * (1.0 + jnp.tanh(c * (x + 0.044715 * x * x * x)))


def _silu(x):
    return x * (1.0 / (1.0 + jnp.exp(-x)))


def _softplus(x):
    return jnp.maximum(x, 0.0) + jnp.log(1.0 + jnp.exp(-jnp.abs(x)))


# ----------------------------- Pallas kernels -------------------------------

def _make_mm_kernel(act):
    def kernel(x_ref, w_ref, b_ref, o_ref):
        acc = jnp.dot(x_ref[...], w_ref[...],
                      preferred_element_type=jnp.float32) + b_ref[...]
        if act == "relu":
            acc = jnp.maximum(acc, 0.0)
        elif act == "gelu":
            acc = _gelu_tanh(acc)
        elif act == "silu":
            acc = _silu(acc)
        o_ref[...] = acc
    return kernel


_MM_KERNELS = {a: _make_mm_kernel(a) for a in ("none", "relu", "gelu", "silu")}


def _ln_kernel(x_ref, g_ref, b_ref, o_ref):
    x = x_ref[...]
    mu = jnp.mean(x, axis=-1, keepdims=True)
    var = jnp.mean((x - mu) ** 2, axis=-1, keepdims=True)
    o_ref[...] = (x - mu) * jax.lax.rsqrt(var + 1e-5) * g_ref[...] + b_ref[...]


def _add_ln_kernel(x_ref, r_ref, g_ref, b_ref, o_ref):
    x = x_ref[...] + r_ref[...]
    mu = jnp.mean(x, axis=-1, keepdims=True)
    var = jnp.mean((x - mu) ** 2, axis=-1, keepdims=True)
    o_ref[...] = (x - mu) * jax.lax.rsqrt(var + 1e-5) * g_ref[...] + b_ref[...]


def _ffn_res_ln_kernel(x_ref, w1_ref, b1_ref, w2_ref, b2_ref, g_ref, bb_ref, o_ref):
    # LN( x + W2 @ relu(W1 @ x + b1) + b2 ): hidden never leaves VMEM.
    x = x_ref[...]
    h = jnp.dot(x.astype(jnp.bfloat16), w1_ref[...],
                preferred_element_type=jnp.float32) + b1_ref[...]
    h = jnp.maximum(h, 0.0)
    y = jnp.dot(h.astype(jnp.bfloat16), w2_ref[...],
                preferred_element_type=jnp.float32) + b2_ref[...]
    r = x + y
    mu = jnp.mean(r, axis=-1, keepdims=True)
    var = jnp.mean((r - mu) ** 2, axis=-1, keepdims=True)
    o_ref[...] = (r - mu) * jax.lax.rsqrt(var + 1e-5) * g_ref[...] + bb_ref[...]


def _cross_attn_kernel(q_ref, k_ref, v_ref, o_ref):
    q = q_ref[...]                                     # (Lq, D) bf16
    k = k_ref[...]                                     # (Lk, D) bf16 (untransposed)
    v = v_ref[...]                                     # (Lk, D) bf16
    scale = 1.0 / math.sqrt(q.shape[-1])
    s = jax.lax.dot_general(q, k, (((1,), (1,)), ((), ())),
                            preferred_element_type=jnp.float32) * scale
    s = s - jnp.max(s, axis=-1, keepdims=True)
    p = jnp.exp(s)
    denom = jnp.sum(p, axis=-1, keepdims=True)
    p = p * pl.reciprocal(denom, approx=True)
    o_ref[...] = jax.lax.dot_general(p.astype(jnp.bfloat16), v,
                                     (((1,), (0,)), ((), ())),
                                     preferred_element_type=jnp.float32)


def _ssm_scan_kernel(dt_ref, bt_ref, cm_ref, xc_ref, z_ref, at_ref, d_ref, y_ref):
    """Selective scan for one batch element.

    dt_ref (L, di) pre-softplus, bt_ref (ds, L), cm_ref (L, ds), xc_ref (L, di),
    z_ref (L, di), at_ref (ds, di) = (-exp(A_log)).T, d_ref (1, di).
    Output y (L, di) = (sum_s h*C + xc*D) * silu(z); state h (ds, di) stays on chip.
    """
    A_T = at_ref[...]
    d_row = d_ref[...]
    bt_all = bt_ref[...]                               # (ds, L)
    L = dt_ref.shape[0]
    ds, di = A_T.shape
    iota = jax.lax.broadcasted_iota(jnp.int32, (L, 1), 0)

    def body(t, h):
        dt_t = _softplus(dt_ref[pl.ds(t, 1), :])       # (1, di)
        x_t = xc_ref[pl.ds(t, 1), :]                   # (1, di)
        z_t = z_ref[pl.ds(t, 1), :]                    # (1, di)
        c_row = cm_ref[pl.ds(t, 1), :]                 # (1, ds)
        # select column t of B via a one-hot matmul (avoids lane-dim transposes)
        e_col = (iota == t).astype(jnp.float32)        # (L, 1)
        b_col = jnp.dot(bt_all, e_col,
                        preferred_element_type=jnp.float32)          # (ds, 1)
        dA = jnp.exp(dt_t * A_T)                       # (ds, di)
        h = dA * h + b_col * (dt_t * x_t)              # rank-1 update, broadcasted
        y_t = jnp.dot(c_row, h, preferred_element_type=jnp.float32)  # (1, di)
        y_t = (y_t + x_t * d_row) * _silu(z_t)
        y_ref[pl.ds(t, 1), :] = y_t
        return h

    h0 = jnp.zeros((ds, di), jnp.float32)
    jax.lax.fori_loop(0, L, body, h0)


# ----------------------------- kernel wrappers -------------------------------

def _row_tiled_call(kernel, row_args, full_args, n_out):
    """Tile 2-D row_args over M; full_args (weights/biases) broadcast to each tile."""
    M = row_args[0].shape[0]
    TILE_M, Mp = _tile_rows(M)
    padded = [jnp.pad(a, ((0, Mp - M), (0, 0))) if Mp != M else a for a in row_args]
    in_specs = ([pl.BlockSpec((TILE_M, a.shape[1]), lambda i: (i, 0)) for a in padded]
                + [pl.BlockSpec(a.shape, lambda i: (0, 0)) for a in full_args])
    out = pl.pallas_call(
        kernel,
        out_shape=jax.ShapeDtypeStruct((Mp, n_out), jnp.float32),
        grid=(Mp // TILE_M,),
        in_specs=in_specs,
        out_specs=pl.BlockSpec((TILE_M, n_out), lambda i: (i, 0)),
        compiler_params=pltpu.CompilerParams(dimension_semantics=("parallel",)),
    )(*padded, *full_args)
    return out[:M] if Mp != M else out


def pallas_matmul(x2, w, b=None, act="none"):
    N = w.shape[1]
    if b is None:
        b = jnp.zeros((N,), jnp.float32)
    return _row_tiled_call(
        _MM_KERNELS[act],
        [x2.astype(jnp.bfloat16)],
        [w.astype(jnp.bfloat16), b.reshape(1, N).astype(jnp.float32)],
        N)


def linear(x, w, b=None, act="none"):
    shp = x.shape
    y = pallas_matmul(x.reshape(-1, shp[-1]), w, b, act=act)
    return y.reshape(shp[:-1] + (w.shape[1],))


def layernorm(x, g, b):
    shp = x.shape
    D = shp[-1]
    out = _row_tiled_call(_ln_kernel,
                          [x.reshape(-1, D).astype(jnp.float32)],
                          [g.reshape(1, D).astype(jnp.float32),
                           b.reshape(1, D).astype(jnp.float32)], D)
    return out.reshape(shp)


def add_layernorm(x, r, g, b):
    shp = x.shape
    D = shp[-1]
    out = _row_tiled_call(_add_ln_kernel,
                          [x.reshape(-1, D).astype(jnp.float32),
                           r.reshape(-1, D).astype(jnp.float32)],
                          [g.reshape(1, D).astype(jnp.float32),
                           b.reshape(1, D).astype(jnp.float32)], D)
    return out.reshape(shp)


def ffn_res_ln(x, w1, b1, w2, b2, g, beta):
    shp = x.shape
    D = shp[-1]
    H = w1.shape[1]
    out = _row_tiled_call(
        _ffn_res_ln_kernel,
        [x.reshape(-1, D).astype(jnp.float32)],
        [w1.astype(jnp.bfloat16), b1.reshape(1, H).astype(jnp.float32),
         w2.astype(jnp.bfloat16), b2.reshape(1, D).astype(jnp.float32),
         g.reshape(1, D).astype(jnp.float32),
         beta.reshape(1, D).astype(jnp.float32)], D)
    return out.reshape(shp)


def cross_attention(q, k, v):
    B, Lq, D = q.shape
    Lk = k.shape[1]
    return pl.pallas_call(
        _cross_attn_kernel,
        out_shape=jax.ShapeDtypeStruct((B, Lq, D), jnp.float32),
        grid=(B,),
        in_specs=[pl.BlockSpec((None, Lq, D), lambda b: (b, 0, 0)),
                  pl.BlockSpec((None, Lk, D), lambda b: (b, 0, 0)),
                  pl.BlockSpec((None, Lk, D), lambda b: (b, 0, 0))],
        out_specs=pl.BlockSpec((None, Lq, D), lambda b: (b, 0, 0)),
        compiler_params=pltpu.CompilerParams(dimension_semantics=("parallel",)),
    )(q.astype(jnp.bfloat16), k.astype(jnp.bfloat16), v.astype(jnp.bfloat16))


def ssm_scan(dt_pre, bmt, cm, xc, z, A_T, d_row):
    B, L, di = xc.shape
    ds = A_T.shape[0]
    f32 = jnp.float32
    return pl.pallas_call(
        _ssm_scan_kernel,
        out_shape=jax.ShapeDtypeStruct((B, L, di), f32),
        grid=(B,),
        in_specs=[pl.BlockSpec((None, L, di), lambda b: (b, 0, 0)),   # dt_pre
                  pl.BlockSpec((None, ds, L), lambda b: (b, 0, 0)),   # B (transposed)
                  pl.BlockSpec((None, L, ds), lambda b: (b, 0, 0)),   # C
                  pl.BlockSpec((None, L, di), lambda b: (b, 0, 0)),   # xc
                  pl.BlockSpec((None, L, di), lambda b: (b, 0, 0)),   # z (gate)
                  pl.BlockSpec((ds, di), lambda b: (0, 0)),           # A^T
                  pl.BlockSpec((1, di), lambda b: (0, 0))],           # D
        out_specs=pl.BlockSpec((None, L, di), lambda b: (b, 0, 0)),
        compiler_params=pltpu.CompilerParams(dimension_semantics=("parallel",)),
    )(dt_pre.astype(f32), bmt.astype(f32), cm.astype(f32),
      xc.astype(f32), z.astype(f32), A_T.astype(f32), d_row.astype(f32))


# ----------------------------- parameter init -------------------------------

class PRNG:
    def __init__(self, seed):
        self.key = jax.random.PRNGKey(seed)

    def next(self):
        self.key, sub = jax.random.split(self.key)
        return sub


def dense_init(rng, shape, scale=0.05):
    return scale * jax.random.normal(rng.next(), shape, dtype=jnp.float32)


def positional_embedding(max_len, d_model):
    pe = np.zeros((max_len, d_model), np.float32)
    pos = np.arange(max_len, dtype=np.float32)[:, None]
    div = np.exp(np.arange(0, d_model, 2, dtype=np.float32)
                 * -(math.log(10000.0) / d_model))
    pe[:, 0::2] = np.sin(pos * div)
    pe[:, 1::2] = np.cos(pos * div)
    return jnp.asarray(pe)


def init_embedding(rng, c_in, d_model, max_len=128):
    # DataEmbedding_wo_temp = TokenEmbedding (circular conv1d, k=3, no bias) + PE.
    return dict(token_w=dense_init(rng, (3 * c_in, d_model)),
                pe=positional_embedding(max_len, d_model))


def data_embedding(p, x):
    B, L, C = x.shape
    xp = jnp.concatenate([x[:, -1:, :], x, x[:, :1, :]], axis=1)     # circular pad
    patches = jnp.concatenate([xp[:, 0:L], xp[:, 1:L + 1], xp[:, 2:L + 2]], axis=-1)
    val = linear(patches, p['token_w'])
    return val + p['pe'][:L][None]


def init_mamba(rng, d_model, d_state, d_conv, expand):
    d_inner = expand * d_model
    dt_rank = max(1, math.ceil(d_model / 16))
    x_proj = dense_init(rng, (d_inner, dt_rank + 2 * d_state))
    dt_proj_w = dense_init(rng, (dt_rank, d_inner))
    dt_proj_b = jnp.full((d_inner,), -2.0, jnp.float32)
    # x_proj(dt-part) and dt_proj are linear with no nonlinearity between:
    # compose them so dt/B/C come from ONE fused matmul in the forward pass.
    dbc_w = jnp.concatenate([x_proj[:, :dt_rank] @ dt_proj_w,
                             x_proj[:, dt_rank:]], axis=1)           # (di, di+2*ds)
    dbc_b = jnp.concatenate([dt_proj_b, jnp.zeros((2 * d_state,), jnp.float32)])
    return dict(
        in_proj=dense_init(rng, (d_model, 2 * d_inner)),
        conv_w=dense_init(rng, (d_conv, d_inner), 0.1),
        conv_b=jnp.zeros((d_inner,), jnp.float32),
        dbc_w=dbc_w, dbc_b=dbc_b,
        A_log=jnp.log(jnp.tile(jnp.arange(1, d_state + 1, dtype=jnp.float32),
                               (d_inner, 1))),
        D=jnp.ones((d_inner,), jnp.float32),
        out_proj=dense_init(rng, (d_inner, d_model)),
    )


def mamba_forward(p, x):
    B, L, _ = x.shape
    d_inner = p['in_proj'].shape[1] // 2
    d_state = p['A_log'].shape[1]
    K = p['conv_w'].shape[0]

    xz = linear(x, p['in_proj'])                       # fused (x | z) projection
    xp_, z = jnp.split(xz, 2, axis=-1)

    # causal depthwise conv (K=2) + SiLU: tiny elementwise chain, stays in XLA.
    xpad = jnp.pad(xp_, ((0, 0), (K - 1, 0), (0, 0)))
    xc = sum(xpad[:, i:i + L, :] * p['conv_w'][i] for i in range(K)) + p['conv_b']
    xc = jax.nn.silu(xc)

    dbc = linear(xc, p['dbc_w'], p['dbc_b'])           # fused dt/B/C projection
    dt_pre = dbc[..., :d_inner]
    Bm = dbc[..., d_inner:d_inner + d_state]
    Cm = dbc[..., d_inner + d_state:]

    A_T = -jnp.exp(p['A_log']).T                       # (ds, di)
    y = ssm_scan(dt_pre, jnp.swapaxes(Bm, 1, 2), Cm, xc, z, A_T,
                 p['D'].reshape(1, -1))                # scan + D-skip + SiLU gate fused
    return linear(y, p['out_proj'])


def init_encoder(rng, d_model, d_state, d_ff=512, n_layers=2):
    layers = []
    for _ in range(n_layers):
        layers.append(dict(
            m_fwd=init_mamba(rng, d_model, d_state, 2, 1),
            m_bwd=init_mamba(rng, d_model, d_state, 2, 1),
            ln1_g=jnp.ones((d_model,)), ln1_b=jnp.zeros((d_model,)),
            ln2_g=jnp.ones((d_model,)), ln2_b=jnp.zeros((d_model,)),
            ff1_w=dense_init(rng, (d_model, d_ff)), ff1_b=jnp.zeros((d_ff,)),
            ff2_w=dense_init(rng, (d_ff, d_model)), ff2_b=jnp.zeros((d_model,)),
        ))
    return dict(layers=layers,
                norm_g=jnp.ones((d_model,)), norm_b=jnp.zeros((d_model,)))


def encoder_forward(p, x):
    # S-Mamba style EncoderLayer: bidirectional Mamba "attention" + FFN,
    # with residual+LN and FFN+residual+LN each fused into single kernels.
    for lp in p['layers']:
        new_x = mamba_forward(lp['m_fwd'], x) + jnp.flip(
            mamba_forward(lp['m_bwd'], jnp.flip(x, axis=1)), axis=1)
        x = add_layernorm(x, new_x, lp['ln1_g'], lp['ln1_b'])
        x = ffn_res_ln(x, lp['ff1_w'], lp['ff1_b'], lp['ff2_w'], lp['ff2_b'],
                       lp['ln2_g'], lp['ln2_b'])
    x = layernorm(x, p['norm_g'], p['norm_b'])
    return x, None


def init_inception(rng, c_in, c_out, num_kernels=3):
    branches = []
    for i in range(num_kernels):
        K = 2 * i + 1
        branches.append(dict(w=dense_init(rng, (c_in * K * K, c_out)),
                             b=jnp.zeros((c_out,), jnp.float32)))
    return branches


def inception_block(branches, x_nchw, act="none"):
    # All branch convs as im2col patches concatenated along features and run as
    # ONE Pallas matmul; the mean over branches is folded into the weights/bias.
    B, C, H, W = x_nchw.shape
    nb = len(branches)
    feats = []
    for br in branches:
        K = int(round(math.sqrt(br['w'].shape[0] // C)))
        if K == 1:
            pc = jnp.moveaxis(x_nchw, 1, -1).reshape(B * H * W, C)
        else:
            patches = jax.lax.conv_general_dilated_patches(
                x_nchw, filter_shape=(K, K), window_strides=(1, 1), padding='SAME')
            pc = jnp.moveaxis(patches, 1, -1).reshape(B * H * W, C * K * K)
        feats.append(pc)
    big = jnp.concatenate(feats, axis=-1)
    w_all = jnp.concatenate([br['w'] for br in branches], axis=0) / float(nb)
    b_all = sum(br['b'] for br in branches) / float(nb)
    y = pallas_matmul(big, w_all, b_all, act=act)
    return jnp.moveaxis(y.reshape(B, H, W, -1), -1, 1)


def conv_seq(p, x_nchw):
    y = inception_block(p['inc1'], x_nchw, act="gelu")   # GELU fused as epilogue
    return inception_block(p['inc2'], y, act="none")


def init_graph_block(rng, n_nodes, d_model, node_dim=16):
    # TODO(synk): original GraphBlock source not provided; adaptive-adjacency GCN
    # (MTGNN-style) stand-in with Pallas matmuls for node mixing.
    return dict(e1=dense_init(rng, (n_nodes, node_dim), 0.5),
                e2=dense_init(rng, (n_nodes, node_dim), 0.5),
                w=dense_init(rng, (d_model, d_model)),
                b=jnp.zeros((d_model,), jnp.float32))


def graph_block(p, x):
    B, E, D = x.shape
    logits = jnp.dot(p['e1'], p['e2'].T)                 # parameter-only, XLA
    A = jax.nn.softmax(jax.nn.relu(logits), axis=-1)     # (E, E)
    xe = jnp.moveaxis(x, 1, 0).reshape(E, B * D)
    h = jnp.moveaxis(pallas_matmul(A, xe).reshape(E, B, D), 0, 1)
    out = linear(h, p['w'], p['b'], act="gelu")          # matmul+GELU fused
    return out + x


def init_stim(rng, d_model, d_inner):
    # TODO(synk): exact STIM (cross selective-scan) source not provided; gated
    # cross interaction stand-in, with q/z and k/v projections fused pairwise.
    return dict(wqz=dense_init(rng, (d_model, 2 * d_inner)),
                wkv=dense_init(rng, (d_model, 2 * d_inner)),
                wo=dense_init(rng, (d_inner, d_model)))


def stim_forward(p, a, b):
    di = p['wo'].shape[0]
    qz = linear(a, p['wqz'])
    kv = linear(b, p['wkv'])
    q, zg = qz[..., :di], qz[..., di:]
    k, v = kv[..., :di], kv[..., di:]
    ctx = cross_attention(q, k, v)
    gate = jax.nn.silu(zg)                               # XLA elementwise (fused)
    return linear(ctx * gate, p['wo'])


def init_model(cfg, seed=42):
    rng = PRNG(seed)
    n1, n2, E, T = cfg['n1'], cfg['n2'], cfg['enc_in'], cfg['seq_len']
    return dict(
        x_emb=init_embedding(rng, E, n1),
        x_ive_emb=init_embedding(rng, T, n2),
        encoder1=init_encoder(rng, n1, cfg['d_state']),
        encoder2=init_encoder(rng, n2, cfg['d_state']),
        stim=init_stim(rng, n1, n1),
        linear1_w=dense_init(rng, (n1, E)), linear1_b=jnp.zeros((E,)),
        linear2_w=dense_init(rng, (n1, T)), linear2_b=jnp.zeros((T,)),
        linear_cat_w=dense_init(rng, (2 * T, T)), linear_cat_b=jnp.zeros((T,)),
        linear3_w=dense_init(rng, (T, cfg['pred_len'])),
        linear3_b=jnp.zeros((cfg['pred_len'],)),
        linear_n2_n1_w=dense_init(rng, (n2, n1)), linear_n2_n1_b=jnp.zeros((n1,)),
        gconv=init_graph_block(rng, E, n2),
        conv=dict(inc1=init_inception(rng, n1, 16, 3),
                  inc2=init_inception(rng, 16, n1, 3)),
    )


# ------------------------------- forward stages ------------------------------

@jax.jit
def _prep_stage(emb_x, emb_ive, x):
    means = jnp.mean(x, axis=1, keepdims=True)
    xn = x - means
    stdev = jnp.sqrt(jnp.var(xn, axis=1, keepdims=True) + 1e-5)
    xn = xn / stdev
    x_ive = data_embedding(emb_ive, jnp.transpose(xn, (0, 2, 1)))   # (B, E, n2)
    xe = data_embedding(emb_x, xn)                                  # (B, T, n1)
    xf = jnp.fft.rfft(xe.astype(jnp.float32), axis=1)
    amp = jnp.abs(xf)
    freq_list = amp.mean(0).mean(-1)
    freq_list = freq_list.at[0].set(0.0)
    return xe, x_ive, means, stdev, freq_list, amp.mean(-1)


@partial(jax.jit, static_argnames=("scales",))
def _main_stage(params, xe, x_ive, means, stdev, sw, *, scales):
    B, T, N = xe.shape

    res_f_m = []
    for scale in scales:
        if T % scale != 0:
            length = (T // scale + 1) * scale
            out = jnp.concatenate(
                [xe, jnp.zeros((B, length - T, N), xe.dtype)], axis=1)
        else:
            length = T
            out = xe
        out = out.reshape(B, length // scale, scale, N).transpose(0, 3, 1, 2)
        out = conv_seq(params['conv'], out)
        out_m = out.transpose(0, 2, 3, 1).reshape(B, -1, N)[:, :T, :]
        out_m, _ = encoder_forward(params['encoder1'], out_m)
        res_f_m.append(out_m)
    res_f_m = jnp.stack(res_f_m, axis=-1)                 # (B, T, N, k)
    sw_soft = jax.nn.softmax(sw, axis=1)[:, None, None, :]
    out_m = jnp.sum(res_f_m * sw_soft * sw_soft, axis=-1) + xe  # weight applied twice (as in torch)

    out_g = graph_block(params['gconv'], x_ive)
    out_g, _ = encoder_forward(params['encoder2'], out_g)
    out_g = out_g + x_ive
    out_g = linear(out_g, params['linear_n2_n1_w'], params['linear_n2_n1_b'])

    out_g_cross_out_m = stim_forward(params['stim'], out_g, out_m) + out_g
    out_m_cross_out_g = stim_forward(params['stim'], out_m, out_g) + out_m

    out_m_cross_out_g = linear(out_m_cross_out_g, params['linear1_w'], params['linear1_b'])
    out_m_cross_out_g = jnp.transpose(out_m_cross_out_g, (0, 2, 1))   # (B, enc_in, T)
    out_g_cross_out_m = linear(out_g_cross_out_m, params['linear2_w'], params['linear2_b'])

    x_cat = jnp.concatenate([out_m_cross_out_g, out_g_cross_out_m], axis=-1)
    # linear_cat immediately followed by linear3 (no activation) -> one composed matmul
    w_cat3 = jnp.dot(params['linear_cat_w'], params['linear3_w'])
    b_cat3 = jnp.dot(params['linear_cat_b'], params['linear3_w']) + params['linear3_b']
    x_out = linear(x_cat, w_cat3, b_cat3)
    x_out = jnp.transpose(x_out, (0, 2, 1))               # (B, pred_len, enc_in)

    x_out = x_out * stdev[:, 0:1, :] + means[:, 0:1, :]
    return x_out


def model_forward(params, x, cfg):
    xe, x_ive, means, stdev, freq_list, amp_mean = _prep_stage(
        params['x_emb'], params['x_ive_emb'], x)
    # TODO(synk): top-k period selection must be concrete (drives reshape sizes,
    # exactly as torch's .detach().cpu().numpy()); only this tiny vector syncs to host.
    k = cfg['top_k']
    T = x.shape[1]
    freq_np = np.asarray(jax.device_get(freq_list))
    top_idx = np.argsort(-freq_np)[:k]
    scales = tuple(int(T // int(f)) for f in top_idx)
    sw = amp_mean[:, top_idx]                              # (B, k)
    return _main_stage(params, xe, x_ive, means, stdev, sw, scales=scales)


# ----------------------------------- main ------------------------------------

if __name__ == "__main__":
    cfg = dict(enc_in=8, seq_len=32, pred_len=16, n1=64, n2=32,
               d_state=8, dconv=2, e_fact=1, top_k=2)
    params = init_model(cfg, seed=42)
    x = jax.random.normal(jax.random.PRNGKey(0),
                          (2, cfg['seq_len'], cfg['enc_in']), dtype=jnp.float32)
    y = model_forward(params, x, cfg)
    jax.block_until_ready(y)
    assert y.shape == (2, cfg['pred_len'], cfg['enc_in']), y.shape
    assert bool(jnp.all(jnp.isfinite(y)))
    print("KERNEL_OK")
</pallas_src>

<mosaic_0001>
module attributes {stable_mosaic.version = 11 : i64} {
  func.func @kernel(%arg0: i32, %arg1: memref<64x24xbf16, #tpu.memory_space<vmem>>, %arg2: memref<24x64xbf16, #tpu.memory_space<vmem>>, %arg3: memref<1x64xf32, #tpu.memory_space<vmem>>, %arg4: memref<64x64xf32, #tpu.memory_space<vmem>>) attributes {dimension_semantics = [#tpu.dimension_semantics<parallel>], iteration_bounds = array<i64: 1>, scalar_prefetch = 0 : i64, scratch_operands = 0 : i64, tpu.core_type = #tpu.core_type<tc>, window_params = [{transform_indices = @transform_0, window_bounds = array<i64: 64, 24>}, {pipeline_mode = #tpu.pipeline_mode<synchronous>, transform_indices = @transform_1, window_bounds = array<i64: 24, 64>}, {pipeline_mode = #tpu.pipeline_mode<synchronous>, transform_indices = @transform_2, window_bounds = array<i64: 1, 64>}, {transform_indices = @transform_3, window_bounds = array<i64: 64, 64>}]} {
    %c0 = arith.constant 0 : index
    %c0_0 = arith.constant 0 : index
    %0 = vector.load %arg1[%c0, %c0_0] : memref<64x24xbf16, #tpu.memory_space<vmem>>, vector<64x24xbf16>
    %c0_1 = arith.constant 0 : index
    %c0_2 = arith.constant 0 : index
    %1 = vector.load %arg2[%c0_1, %c0_2] : memref<24x64xbf16, #tpu.memory_space<vmem>>, vector<24x64xbf16>
    %cst = arith.constant dense<0.000000e+00> : vector<64x64xf32>
    %2 = tpu.matmul %0, %1, %cst {dimension_numbers = #tpu.dot_dimension_numbers<[1], [0], [0], [1], [0, 0, 1, 1], [], []>} : vector<64x24xbf16>, vector<24x64xbf16>, vector<64x64xf32> -> vector<64x64xf32>
    %c0_3 = arith.constant 0 : index
    %c0_4 = arith.constant 0 : index
    %3 = vector.load %arg3[%c0_3, %c0_4] : memref<1x64xf32, #tpu.memory_space<vmem>>, vector<1x64xf32>
    %4 = vector.broadcast %3 : vector<1x64xf32> to vector<64x64xf32>
    %5 = arith.addf %2, %4 : vector<64x64xf32>
    %c0_5 = arith.constant 0 : index
    %c0_6 = arith.constant 0 : index
    %6 = vector.load %arg4[%c0_5, %c0_6] : memref<64x64xf32, #tpu.memory_space<vmem>>, vector<64x64xf32>
    tpu.vector_store %arg4[%c0_5, %c0_6], %5 {strides = array<i32>} : memref<64x64xf32, #tpu.memory_space<vmem>>, vector<64x64xf32>,
    return
  }
  func.func @transform_0(%arg0: i32) -> (i32, i32) {
    %c0_i32 = arith.constant 0 : i32
    %c0_i32_0 = arith.constant 0 : i32
    return %arg0, %c0_i32 : i32, i32
  }
  func.func @transform_1(%arg0: i32) -> (i32, i32) {
    %c0_i32 = arith.constant 0 : i32
    %c0_i32_0 = arith.constant 0 : i32
    %c0_i32_1 = arith.constant 0 : i32
    return %c0_i32, %c0_i32_0 : i32, i32
  }
  func.func @transform_2(%arg0: i32) -> (i32, i32) {
    %c0_i32 = arith.constant 0 : i32
    %c0_i32_0 = arith.constant 0 : i32
    %c0_i32_1 = arith.constant 0 : i32
    return %c0_i32, %c0_i32_0 : i32, i32
  }
  func.func @transform_3(%arg0: i32) -> (i32, i32) {
    %c0_i32 = arith.constant 0 : i32
    %c0_i32_0 = arith.constant 0 : i32
    return %arg0, %c0_i32 : i32, i32
  }
}

module attributes {stable_mosaic.version = 11 : i64} {
  func.func @kernel(%arg0: i32, %arg1: memref<16x96xbf16, #tpu.memory_space<vmem>>, %arg2: memref<96x32xbf16, #tpu.memory_space<vmem>>, %arg3: memref<1x32xf32, #tpu.memory_space<vmem>>, %arg4: memref<16x32xf32, #tpu.memory_space<vmem>>) attributes {dimension_semantics = [#tpu.dimension_semantics<parallel>], iteration_bounds = array<i64: 1>, scalar_prefetch = 0 : i64, scratch_operands = 0 : i64, tpu.core_type = #tpu.core_type<tc>, window_params = [{transform_indices = @transform_0, window_bounds = array<i64: 16, 96>}, {pipeline_mode = #tpu.pipeline_mode<synchronous>, transform_indices = @transform_1, window_bounds = array<i64: 96, 32>}, {pipeline_mode = #tpu.pipeline_mode<synchronous>, transform_indices = @transform_2, window_bounds = array<i64: 1, 32>}, {transform_indices = @transform_3, window_bounds = array<i64: 16, 32>}]} {
    %c0 = arith.constant 0 : index
    %c0_0 = arith.constant 0 : index
    %0 = vector.load %arg1[%c0, %c0_0] : memref<16x96xbf16, #tpu.memory_space<vmem>>, vector<16x96xbf16>
    %c0_1 = arith.constant 0 : index
    %c0_2 = arith.constant 0 : index
    %1 = vector.load %arg2[%c0_1, %c0_2] : memref<96x32xbf16, #tpu.memory_space<vmem>>, vector<96x32xbf16>
    %cst = arith.constant dense<0.000000e+00> : vector<16x32xf32>
    %2 = tpu.matmul %0, %1, %cst {dimension_numbers = #tpu.dot_dimension_numbers<[1], [0], [0], [1], [0, 0, 1, 1], [], []>} : vector<16x96xbf16>, vector<96x32xbf16>, vector<16x32xf32> -> vector<16x32xf32>
    %c0_3 = arith.constant 0 : index
    %c0_4 = arith.constant 0 : index
    %3 = vector.load %arg3[%c0_3, %c0_4] : memref<1x32xf32, #tpu.memory_space<vmem>>, vector<1x32xf32>
    %4 = vector.broadcast %3 : vector<1x32xf32> to vector<16x32xf32>
    %5 = arith.addf %2, %4 : vector<16x32xf32>
    %c0_5 = arith.constant 0 : index
    %c0_6 = arith.constant 0 : index
    %6 = vector.load %arg4[%c0_5, %c0_6] : memref<16x32xf32, #tpu.memory_space<vmem>>, vector<16x32xf32>
    tpu.vector_store %arg4[%c0_5, %c0_6], %5 {strides = array<i32>} : memref<16x32xf32, #tpu.memory_space<vmem>>, vector<16x32xf32>,
    return
  }
  func.func @transform_0(%arg0: i32) -> (i32, i32) {
    %c0_i32 = arith.constant 0 : i32
    %c0_i32_0 = arith.constant 0 : i32
    return %arg0, %c0_i32 : i32, i32
  }
  func.func @transform_1(%arg0: i32) -> (i32, i32) {
    %c0_i32 = arith.constant 0 : i32
    %c0_i32_0 = arith.constant 0 : i32
    %c0_i32_1 = arith.constant 0 : i32
    return %c0_i32, %c0_i32_0 : i32, i32
  }
  func.func @transform_2(%arg0: i32) -> (i32, i32) {
    %c0_i32 = arith.constant 0 : i32
    %c0_i32_0 = arith.constant 0 : i32
    %c0_i32_1 = arith.constant 0 : i32
    return %c0_i32, %c0_i32_0 : i32, i32
  }
  func.func @transform_3(%arg0: i32) -> (i32, i32) {
    %c0_i32 = arith.constant 0 : i32
    %c0_i32_0 = arith.constant 0 : i32
    return %arg0, %c0_i32 : i32, i32
  }
}

</mosaic_0001>

<llo_original>
// kernel: _prep_stage.2
$region0: #{_prep_stage.2}
  #allocation0 [shape = 'u32[]', space=smem, size = 0x4, offset = 0x4, fixed_abs, tag = 'smem constant byte address 0x4 - core index']
  #allocation1 [shape = 'u32[72,128]{1,0:T(1,128)}', space=vmem, size = 0x9000, scoped, tag = 'internal scratch']
  %s0 = inlined_call_operand.vmem [shape: bf16[64,24], index: 0, kind: input, shape index: {}]
  %s1 = inlined_call_operand.vmem [shape: bf16[24,64], index: 1, kind: input, shape index: {}]
  %s2 = inlined_call_operand.vmem [shape: f32[1,64], index: 2, kind: input, shape index: {}]
  %s3 = inlined_call_operand.vmem [shape: f32[64,64], index: 3, kind: output, shape index: {}]
  %s4 = sld [smem:[#allocation0]]
  $region22: #{_prep_stage.2} parent=0
    _
  %s6 = ssub.s32 1, %s4
  %s7 = scalar_select 0, %s6, %s4
  // Predicated region
  $region2: #{_prep_stage.2} parent=0 // pred_check
    _
  $region3: #{_prep_stage.2} parent=0 // pred_check_branch
    %9 = sbr.rel (0) target = $region5
  $region4: #{_prep_stage.2} parent=0 // pred_region
    _
  $region5: #{_prep_stage.2} parent=0 // pred_fallthru
    _
  // Predicated region
  $region6: #{_prep_stage.2} parent=0 // pred_check
    _
  $region7: #{_prep_stage.2} parent=0 // pred_check_branch
    %11 = sbr.rel (0) target = $region9
  $region8: #{_prep_stage.2} parent=0 // pred_region
    _
  $region9: #{_prep_stage.2} parent=0 // pred_fallthru
    _
  // Predicated region
  $region10: #{_prep_stage.2} parent=0 // pred_check
    _
  $region11: #{_prep_stage.2} parent=0 // pred_check_branch
    %13 = sbr.rel (0) target = $region13
  $region12: #{_prep_stage.2} parent=0 // pred_region
    _
  $region13: #{_prep_stage.2} parent=0 // pred_fallthru
    _
  %v15 = vld [vmem:[%s0] sm:$0xf]
  %v16 = vld [vmem:[%s0 + $0x4] sm:$0xf]
  %v17 = vld [vmem:[%s0 + $0x8] sm:$0xf]
  %v18 = vld [vmem:[%s0 + $0xc] sm:$0xf]
  %v19 = vld [vmem:[%s0 + $0x10] sm:$0xf]
  %v20 = vld [vmem:[%s0 + $0x14] sm:$0xf]
  %v21 = vld [vmem:[%s0 + $0x18] sm:$0xf]
  %v22 = vld [vmem:[%s0 + $0x1c] sm:$0xf]
  %v23 = vld [vmem:[%s1] sm:$0xf]
  %v24 = vld [vmem:[%s1 + $0x4] sm:$0xf]
  %v25 = vld [vmem:[%s1 + $0x8] sm:$0xf]
  %v26 = vld [vmem:[%s2] sm:$0x1]
  %v28 = vperm.slane %v26, 0
  %v38 = vunpack.c.l.b16 %v15
  %v39 = vunpack.c.l.b16 %v16
  %v40 = vunpack.c.l.b16 %v17
  %v41 = vunpack.c.l.b16 %v18
  %v42 = vunpack.c.l.b16 %v19
  %v43 = vunpack.c.l.b16 %v20
  %v44 = vunpack.c.l.b16 %v21
  %v45 = vunpack.c.l.b16 %v22
  %v46 = vpack.c.b16 %v39, %v38
  %v47 = vpack.c.b16 %v41, %v40
  %v48 = vpack.c.b16 %v43, %v42
  %v49 = vpack.c.b16 %v45, %v44
  %v53 = vunpack.c.l.b16 %v23
  %v54 = vunpack.c.l.b16 %v24
  %v55 = vunpack.c.l.b16 %v25
  %v56 = vpack.c.b16 %v54, %v53
  %v57 = vpack.c.b16 %v55, %v55
  %vm59 = vcmask 195584
  %v61 = vsel %vm59, %v46, 0
  %v64 = vsel %vm59, %v47, 0
  %v67 = vsel %vm59, %v48, 0
  %v70 = vsel %vm59, %v49, 0
  %vm72 = vcmask 1043456
  %v74 = vsel %vm72, %v57, 0
  %76 = vmatpush.bf16.msra.mxu0 0
  %77 = vmatpush.bf16.msra.mxu0 0
  %78 = vmatpush.bf16.msra.mxu0 0
  %79 = vmatpush.bf16.msra.mxu0 0
  %80 = vmatpush.bf16.msra.mxu0 0
  %81 = vmatpush.bf16.msra.mxu0 0
  %82 = vmatpush.bf16.msra.mxu0 %v74
  %83 = vmatpush.bf16.msra.mxu0 %v56
  %84 = vmatmul.bf16.gmra.mxu0 %v61
  %v85 = vpop.f32.mrf.mxu0
  %v86 = vadd.f32 %v28, %v85
  %v87 = vpop.f32.mrf.mxu0
  %v88 = vadd.f32 %v28, %v87
  %89 = vmatmul.bf16.gmra.mxu0 %v64
  %v90 = vpop.f32.mrf.mxu0
  %v91 = vadd.f32 %v28, %v90
  %v92 = vpop.f32.mrf.mxu0
  %v93 = vadd.f32 %v28, %v92
  %94 = vmatmul.bf16.gmra.mxu0 %v67
  %v95 = vpop.f32.mrf.mxu0
  %v96 = vadd.f32 %v28, %v95
  %v97 = vpop.f32.mrf.mxu0
  %v98 = vadd.f32 %v28, %v97
  %99 = vmatmul.bf16.gmra.mxu0 %v70
  %v100 = vpop.f32.mrf.mxu0
  %v101 = vadd.f32 %v28, %v100
  %v102 = vpop.f32.mrf.mxu0
  %v103 = vadd.f32 %v28, %v102
  %104 = vdwg.mxu0
  %vm105 = vcmask 523264
  %106 = vst.msk [vmem:[%s3] sm:$0xff] %vm105, %v86
  %107 = vst.msk [vmem:[%s3 + $0x8] sm:$0xff] %vm105, %v88
  %108 = vst.msk [vmem:[%s3 + $0x10] sm:$0xff] %vm105, %v91
  %109 = vst.msk [vmem:[%s3 + $0x18] sm:$0xff] %vm105, %v93
  %110 = vst.msk [vmem:[%s3 + $0x20] sm:$0xff] %vm105, %v96
  %111 = vst.msk [vmem:[%s3 + $0x28] sm:$0xff] %vm105, %v98
  %112 = vst.msk [vmem:[%s3 + $0x30] sm:$0xff] %vm105, %v101
  %113 = vst.msk [vmem:[%s3 + $0x38] sm:$0xff] %vm105, %v103
  // Predicated region
  $region14: #{_prep_stage.2} parent=0 // pred_check
    _
  $region15: #{_prep_stage.2} parent=0 // pred_check_branch
    %115 = sbr.rel (0) target = $region17
  $region16: #{_prep_stage.2} parent=0 // pred_region
    _
  $region17: #{_prep_stage.2} parent=0 // pred_fallthru
    _
  // Predicated region
  $region18: #{_prep_stage.2} parent=0 // pred_check
    _
  $region19: #{_prep_stage.2} parent=0 // pred_check_branch
    %117 = sbr.rel (0) target = $region21
  $region20: #{_prep_stage.2} parent=0 // pred_region
    _
  $region21: #{_prep_stage.2} parent=0 // pred_fallthru
    _

// kernel: _prep_stage.3
$region0: #{_prep_stage.3}
  #allocation0 [shape = 'u32[]', space=smem, size = 0x4, offset = 0x4, fixed_abs, tag = 'smem constant byte address 0x4 - core index']
  #allocation1 [shape = 'u32[72,128]{1,0:T(1,128)}', space=vmem, size = 0x9000, scoped, tag = 'internal scratch']
  %s0 = inlined_call_operand.vmem [shape: bf16[16,96], index: 0, kind: input, shape index: {}]
  %s1 = inlined_call_operand.vmem [shape: bf16[96,32], index: 1, kind: input, shape index: {}]
  %s2 = inlined_call_operand.vmem [shape: f32[1,32], index: 2, kind: input, shape index: {}]
  %s3 = inlined_call_operand.vmem [shape: f32[16,32], index: 3, kind: output, shape index: {}]
  %s4 = sld [smem:[#allocation0]]
  $region22: #{_prep_stage.3} parent=0
    _
  %s6 = ssub.s32 1, %s4
  %s7 = scalar_select 0, %s6, %s4
  // Predicated region
  $region2: #{_prep_stage.3} parent=0 // pred_check
    _
  $region3: #{_prep_stage.3} parent=0 // pred_check_branch
    %9 = sbr.rel (0) target = $region5
  $region4: #{_prep_stage.3} parent=0 // pred_region
    _
  $region5: #{_prep_stage.3} parent=0 // pred_fallthru
    _
  // Predicated region
  $region6: #{_prep_stage.3} parent=0 // pred_check
    _
  $region7: #{_prep_stage.3} parent=0 // pred_check_branch
    %11 = sbr.rel (0) target = $region9
  $region8: #{_prep_stage.3} parent=0 // pred_region
    _
  $region9: #{_prep_stage.3} parent=0 // pred_fallthru
    _
  // Predicated region
  $region10: #{_prep_stage.3} parent=0 // pred_check
    _
  $region11: #{_prep_stage.3} parent=0 // pred_check_branch
    %13 = sbr.rel (0) target = $region13
  $region12: #{_prep_stage.3} parent=0 // pred_region
    _
  $region13: #{_prep_stage.3} parent=0 // pred_fallthru
    _
  %v15 = vld [vmem:[%s0] sm:$0xf]
  %v16 = vld [vmem:[%s0 + $0x4] sm:$0xf]
  %v17 = vld [vmem:[%s1] sm:$0xf]
  %v18 = vld [vmem:[%s1 + $0x4] sm:$0xf]
  %v19 = vld [vmem:[%s1 + $0x8] sm:$0xf]
  %v20 = vld [vmem:[%s1 + $0xc] sm:$0xf]
  %v21 = vld [vmem:[%s1 + $0x10] sm:$0xf]
  %v22 = vld [vmem:[%s1 + $0x14] sm:$0xf]
  %v23 = vld [vmem:[%s1 + $0x18] sm:$0xf]
  %v24 = vld [vmem:[%s1 + $0x1c] sm:$0xf]
  %v25 = vld [vmem:[%s1 + $0x20] sm:$0xf]
  %v26 = vld [vmem:[%s1 + $0x24] sm:$0xf]
  %v27 = vld [vmem:[%s1 + $0x28] sm:$0xf]
  %v28 = vld [vmem:[%s1 + $0x2c] sm:$0xf]
  %v29 = vld [vmem:[%s2] sm:$0x1]
  %v31 = vperm.slane %v29, 0
  %v35 = vunpack.c.l.b16 %v15
  %v36 = vunpack.c.l.b16 %v16
  %v37 = vpack.c.b16 %v36, %v35
  %v50 = vunpack.c.l.b16 %v17
  %v51 = vunpack.c.l.b16 %v18
  %v52 = vunpack.c.l.b16 %v19
  %v53 = vunpack.c.l.b16 %v20
  %v54 = vunpack.c.l.b16 %v21
  %v55 = vunpack.c.l.b16 %v22
  %v56 = vunpack.c.l.b16 %v23
  %v57 = vunpack.c.l.b16 %v24
  %v58 = vunpack.c.l.b16 %v25
  %v59 = vunpack.c.l.b16 %v26
  %v60 = vunpack.c.l.b16 %v27
  %v61 = vunpack.c.l.b16 %v28
  %v62 = vpack.c.b16 %v51, %v50
  %v63 = vpack.c.b16 %v53, %v52
  %v64 = vpack.c.b16 %v55, %v54
  %v65 = vpack.c.b16 %v57, %v56
  %v66 = vpack.c.b16 %v59, %v58
  %v67 = vpack.c.b16 %v61, %v60
  %vm74 = vcmask 785408
  %v76 = vsel %vm74, %v37, 0
  %78 = vmatpush.bf16.msra.mxu0 0
  %79 = vmatpush.bf16.msra.mxu0 0
  %80 = vmatpush.bf16.msra.mxu0 %v67
  %81 = vmatpush.bf16.msra.mxu0 %v66
  %82 = vmatpush.bf16.msra.mxu0 %v65
  %83 = vmatpush.bf16.msra.mxu0 %v64
  %84 = vmatpush.bf16.msra.mxu0 %v63
  %85 = vmatpush.bf16.msra.mxu0 %v62
  %86 = vmatmul.bf16.gmra.mxu0 %v76
  %v87 = vpop.f32.mrf.mxu0
  %v88 = vadd.f32 %v31, %v87
  %v89 = vpop.f32.mrf.mxu0
  %v90 = vadd.f32 %v31, %v89
  %91 = vdwg.mxu0
  %vm92 = vcmask 261120
  %93 = vst.msk [vmem:[%s3] sm:$0xff] %vm92, %v88
  %94 = vst.msk [vmem:[%s3 + $0x8] sm:$0xff] %vm92, %v90
  // Predicated region
  $region14: #{_prep_stage.3} parent=0 // pred_check
    _
  $region15: #{_prep_stage.3} parent=0 // pred_check_branch
    %96 = sbr.rel (0) target = $region17
  $region16: #{_prep_stage.3} parent=0 // pred_region
    _
  $region17: #{_prep_stage.3} parent=0 // pred_fallthru
    _
  // Predicated region
  $region18: #{_prep_stage.3} parent=0 // pred_check
    _
  $region19: #{_prep_stage.3} parent=0 // pred_check_branch
    %98 = sbr.rel (0) target = $region21
  $region20: #{_prep_stage.3} parent=0 // pred_region
    _
  $region21: #{_prep_stage.3} parent=0 // pred_fallthru
    _

</llo_original>
